<compile_context>
chip_gen: v7x
topology: tpu7x:2x2x1
jax: 0.10.0
libtpu: 0.0.40
codegen_flags: <defaults>
</compile_context>

<pallas_src>
import functools

import jax
import jax.numpy as jnp
from jax.experimental import pallas as pl
from jax.experimental.pallas import tpu as pltpu

_LANES = 128


def _round_up(x, m):
    return ((x + m - 1) // m) * m


def _device_kind():
    try:
        return jax.devices()[0].device_kind.lower()
    except Exception:
        return ""


def _num_tensorcores(kind):
    # Single-TC chips: v5e / v6e ("lite" parts). v4 / v5p (megacore) and v7x
    # have 2 TensorCores. Unknown -> assume 2 (partials path is correct
    # everywhere, just slightly more overhead on single-TC parts).
    if any(tag in kind for tag in ("v5 lite", "v5e", "v6 lite", "v6e", "lite")):
        return 1
    return 2


def _vmem_capacity_bytes(kind):
    try:
        cap = int(pltpu.get_tpu_info().vmem_capacity_bytes)
    except Exception:
        cap = 64 * 1024 * 1024
    if "7" in kind:
        # v7x physical VMEM is 64 MiB per TensorCore; clamp in case the query
        # reports a per-chip figure.
        cap = min(cap, 64 * 1024 * 1024)
    return cap


def _target_block_bytes(kind):
    # Keep the ~0.35 us per-grid-step overhead small vs per-step DMA time.
    if "v5 lite" in kind or "v5e" in kind:
        return 1 << 20          # ~0.8 TB/s HBM
    if "v6" in kind:
        return 2 << 20          # ~1.4 TB/s HBM
    return 4 << 20              # v7x (~3.2 TB/s) / v4 / v5p / unknown


def _tile_loss_sum(o1_ref, o2_ref, lbl_ref, *, margin, eps, true_b,
                   block_rows, mask_ragged):
    """Sum of per-row contrastive losses over the current (TB, D) tile."""
    o1 = o1_ref[...].astype(jnp.float32)
    o2 = o2_ref[...].astype(jnp.float32)
    lbl = lbl_ref[...].astype(jnp.float32)

    # F.pairwise_distance adds eps to the difference before the norm.
    diff = o1 - o2 + eps                                      # (TB, D)  VPU
    sq_dist = jnp.sum(diff * diff, axis=-1, keepdims=True)    # (TB, 1)  XLU
    d = jnp.sqrt(sq_dist)                                     # (TB, 1)  EUP
    hinge = jnp.maximum(margin - d, 0.0)
    # Reuse sq_dist for the similar-pair term (saves the d*d recompute).
    per_row = (1.0 - lbl) * sq_dist + lbl * (hinge * hinge)   # (TB, 1)

    if mask_ragged:
        # Only emitted when B % block_rows != 0. Keep the select form: padded
        # rows may contain stale/NaN VMEM, so 0 * NaN masking would be wrong.
        row_ids = pl.program_id(0) * block_rows + jax.lax.broadcasted_iota(
            jnp.int32, (block_rows, 1), 0)
        per_row = jnp.where(row_ids < true_b, per_row, 0.0)

    return jnp.sum(per_row)


def _contrastive_partials_kernel(o1_ref, o2_ref, lbl_ref, out_ref, **kw):
    # Multi-TensorCore path: one lane-dense (1, 128) partial row per grid step.
    partial = _tile_loss_sum(o1_ref, o2_ref, lbl_ref, **kw)
    out_ref[...] = jnp.full(out_ref.shape, partial, dtype=jnp.float32)


def _contrastive_fused_kernel(o1_ref, o2_ref, lbl_ref, out_ref, *, inv_b, **kw):
    # Single-TensorCore path: output block is resident across the grid and is
    # used as the accumulator; finalize (scale by 1/B) at the last step.
    i = pl.program_id(0)

    @pl.when(i == 0)
    def _():
        out_ref[...] = jnp.zeros_like(out_ref)

    out_ref[...] += _tile_loss_sum(o1_ref, o2_ref, lbl_ref, **kw)

    @pl.when(i == pl.num_programs(0) - 1)
    def _():
        out_ref[...] = out_ref[...] * inv_b


def contrastive_loss(output1, output2, label, *, margin=2.0, eps=1e-6,
                     block_rows=None):
    B, D = output1.shape
    assert output2.shape == (B, D)
    label2d = jnp.reshape(label, (B, 1)).astype(jnp.float32)

    itemsize = max(jnp.dtype(output1.dtype).itemsize,
                   jnp.dtype(output2.dtype).itemsize)
    sublane = max(8, 32 // itemsize)        # 8 f32 / 16 bf16 / 32 int8

    kind = _device_kind()
    num_tc = _num_tensorcores(kind)
    vmem_cap = _vmem_capacity_bytes(kind)

    # TODO(synk): for D < 128 the lane dim is padded to 128 in VMEM and the
    # VPU runs lane-sparse; folding the feature axis (or an XLA fallback) would
    # be more efficient, but the kernel remains correct for any D.
    if block_rows is None:
        tb = _target_block_bytes(kind) // max(1, D * itemsize)
        tb = max(sublane, min(4096, (tb // sublane) * sublane))
        if num_tc >= 2:
            # Guarantee >= 2 grid steps (when B allows) so both TensorCores
            # stream from HBM and the pipeline has something to overlap.
            half = max(sublane, (pl.cdiv(B, 2) // sublane) * sublane)
            tb = min(tb, half)
        block_rows = min(tb, _round_up(B, sublane))
    block_rows = max(sublane, _round_up(int(block_rows), sublane))

    num_blocks = pl.cdiv(B, block_rows)
    mask_ragged = (B % block_rows) != 0

    # VMEM budget from actual lane-padded block footprints (x2 pipeline bufs).
    in_block = block_rows * D * itemsize
    lbl_block = block_rows * _LANES * 4      # (TB, 1) f32 tile pads to 128 lanes
    out_block = _LANES * 4
    need = 2 * (2 * in_block) + 2 * lbl_block + 2 * out_block
    headroom = 4 << 20
    vmem_limit = max(need + headroom, 16 << 20)
    if vmem_limit > vmem_cap:
        raise ValueError(
            f"ContrastiveLoss tile does not fit VMEM: need {need} B "
            f"(+{headroom} B headroom) > capacity {vmem_cap} B; reduce D "
            f"or block_rows.")

    common = dict(margin=float(margin), eps=float(eps), true_b=int(B),
                  block_rows=int(block_rows), mask_ragged=bool(mask_ragged))

    in_specs = [
        pl.BlockSpec((block_rows, D), lambda i: (i, 0)),
        pl.BlockSpec((block_rows, D), lambda i: (i, 0)),
        pl.BlockSpec((block_rows, 1), lambda i: (i, 0)),
    ]

    if num_tc >= 2:
        # 2-TC parts: per-block partial sums, "parallel" axis shards across
        # cores; tiny sum/B finalize in the wrapper.
        kernel = functools.partial(_contrastive_partials_kernel, **common)
        partials = pl.pallas_call(
            kernel,
            out_shape=jax.ShapeDtypeStruct((num_blocks, _LANES), jnp.float32),
            grid=(num_blocks,),
            in_specs=in_specs,
            out_specs=pl.BlockSpec((1, _LANES), lambda i: (i, 0)),
            compiler_params=pltpu.CompilerParams(
                dimension_semantics=("parallel",),
                vmem_limit_bytes=int(vmem_limit)),
        )(output1, output2, label2d)
        return jnp.sum(partials[:, 0]) / B

    # Single-TC parts: accumulate + finalize in-kernel, no partials writeback
    # and no separate XLA reduction launch.
    kernel = functools.partial(_contrastive_fused_kernel,
                               inv_b=1.0 / float(B), **common)
    out = pl.pallas_call(
        kernel,
        out_shape=jax.ShapeDtypeStruct((1, _LANES), jnp.float32),
        grid=(num_blocks,),
        in_specs=in_specs,
        out_specs=pl.BlockSpec((1, _LANES), lambda i: (0, 0)),
        compiler_params=pltpu.CompilerParams(
            dimension_semantics=("arbitrary",),
            vmem_limit_bytes=int(vmem_limit)),
    )(output1, output2, label2d)
    return out[0, 0]


def contrastive_loss_ref(output1, output2, label, *, margin=2.0, eps=1e-6):
    # Pure-JAX reference mirroring the PyTorch module.
    o1 = output1.astype(jnp.float32)
    o2 = output2.astype(jnp.float32)
    lbl = label.reshape(-1, 1).astype(jnp.float32)
    d = jnp.sqrt(jnp.sum((o1 - o2 + eps) ** 2, axis=-1, keepdims=True))
    return jnp.mean((1.0 - lbl) * d ** 2
                    + lbl * jnp.maximum(margin - d, 0.0) ** 2)


if __name__ == "__main__":
    key = jax.random.PRNGKey(0)
    keys = jax.random.split(key, 9)

    # 1) Small siamese-style embedding batch: batch=8, hidden=32.
    B, D = 8, 32
    o1 = jax.random.normal(keys[0], (B, D), dtype=jnp.float32)
    o2 = jax.random.normal(keys[1], (B, D), dtype=jnp.float32)
    lbl = jax.random.bernoulli(keys[2], p=0.5, shape=(B, 1)).astype(jnp.float32)

    loss = jax.block_until_ready(contrastive_loss(o1, o2, lbl, margin=2.0))
    ref = contrastive_loss_ref(o1, o2, lbl, margin=2.0)
    assert jnp.allclose(loss, ref, rtol=1e-5, atol=1e-5), (loss, ref)

    # 2) Tiled + ragged-last-block path (B not a multiple of block_rows).
    B2, D2 = 20, 128
    o1b = jax.random.normal(keys[3], (B2, D2), dtype=jnp.float32)
    o2b = jax.random.normal(keys[4], (B2, D2), dtype=jnp.float32)
    lblb = jax.random.bernoulli(keys[5], p=0.5, shape=(B2, 1)).astype(jnp.float32)

    loss2 = jax.block_until_ready(
        contrastive_loss(o1b, o2b, lblb, margin=2.0, block_rows=8))
    ref2 = contrastive_loss_ref(o1b, o2b, lblb, margin=2.0)
    assert jnp.allclose(loss2, ref2, rtol=1e-5, atol=1e-5), (loss2, ref2)

    # 3) Default block-size heuristic, lane-dense D, flat label vector.
    B3, D3 = 64, 128
    o1c = jax.random.normal(keys[6], (B3, D3), dtype=jnp.float32)
    o2c = jax.random.normal(keys[7], (B3, D3), dtype=jnp.float32)
    lblc = jax.random.bernoulli(keys[8], p=0.5, shape=(B3,)).astype(jnp.float32)

    loss3 = jax.block_until_ready(contrastive_loss(o1c, o2c, lblc, margin=2.0))
    ref3 = contrastive_loss_ref(o1c, o2c, lblc, margin=2.0)
    assert jnp.allclose(loss3, ref3, rtol=1e-5, atol=1e-5), (loss3, ref3)

    print("KERNEL_OK")
</pallas_src>

<mosaic_0001>
module attributes {stable_mosaic.version = 11 : i64} {
  func.func @_contrastive_partials_kernel(%arg0: i32, %arg1: memref<8x32xf32, #tpu.memory_space<vmem>>, %arg2: memref<8x32xf32, #tpu.memory_space<vmem>>, %arg3: memref<8x1xf32, #tpu.memory_space<vmem>>, %arg4: memref<1x128xf32, #tpu.memory_space<vmem>>) attributes {dimension_semantics = [#tpu.dimension_semantics<parallel>], iteration_bounds = array<i64: 1>, scalar_prefetch = 0 : i64, scratch_operands = 0 : i64, tpu.core_type = #tpu.core_type<tc>, window_params = [{transform_indices = @transform_0, window_bounds = array<i64: 8, 32>}, {transform_indices = @transform_1, window_bounds = array<i64: 8, 32>}, {transform_indices = @transform_2, window_bounds = array<i64: 8, 1>}, {transform_indices = @transform_3, window_bounds = array<i64: 1, 128>}]} {
    %c0 = arith.constant 0 : index
    %c0_0 = arith.constant 0 : index
    %0 = vector.load %arg1[%c0, %c0_0] : memref<8x32xf32, #tpu.memory_space<vmem>>, vector<8x32xf32>
    %c0_1 = arith.constant 0 : index
    %c0_2 = arith.constant 0 : index
    %1 = vector.load %arg2[%c0_1, %c0_2] : memref<8x32xf32, #tpu.memory_space<vmem>>, vector<8x32xf32>
    %c0_3 = arith.constant 0 : index
    %c0_4 = arith.constant 0 : index
    %2 = vector.load %arg3[%c0_3, %c0_4] : memref<8x1xf32, #tpu.memory_space<vmem>>, vector<8x1xf32>
    %3 = arith.subf %0, %1 : vector<8x32xf32>
    %cst = arith.constant 9.99999997E-7 : f32
    %4 = vector.broadcast %cst : f32 to vector<8x32xf32>
    %5 = arith.addf %3, %4 : vector<8x32xf32>
    %6 = arith.mulf %5, %5 : vector<8x32xf32>
    %cst_5 = arith.constant dense<0.000000e+00> : vector<8xf32>
    %7 = vector.multi_reduction <add>, %6, %cst_5 [1] : vector<8x32xf32> to vector<8xf32>
    %8 = vector.shape_cast %7 : vector<8xf32> to vector<8x1xf32>
    %9 = math.sqrt %8 : vector<8x1xf32>
    %cst_6 = arith.constant 2.000000e+00 : f32
    %10 = vector.broadcast %cst_6 : f32 to vector<8x1xf32>
    %11 = arith.subf %10, %9 : vector<8x1xf32>
    %cst_7 = arith.constant 0.000000e+00 : f32
    %12 = vector.broadcast %cst_7 : f32 to vector<8x1xf32>
    %13 = arith.maximumf %11, %12 : vector<8x1xf32>
    %cst_8 = arith.constant 1.000000e+00 : f32
    %14 = vector.broadcast %cst_8 : f32 to vector<8x1xf32>
    %15 = arith.subf %14, %2 : vector<8x1xf32>
    %16 = arith.mulf %15, %8 : vector<8x1xf32>
    %17 = arith.mulf %13, %13 : vector<8x1xf32>
    %18 = arith.mulf %2, %17 : vector<8x1xf32>
    %19 = arith.addf %16, %18 : vector<8x1xf32>
    %20 = vector.shape_cast %19 : vector<8x1xf32> to vector<1x8x1xf32>
    %cst_9 = arith.constant dense<0.000000e+00> : vector<1xf32>
    %21 = vector.multi_reduction <add>, %20, %cst_9 [1, 2] : vector<1x8x1xf32> to vector<1xf32>
    %22 = vector.shape_cast %21 : vector<1xf32> to vector<1x1x1xf32>
    %23 = vector.extract %22[0, 0, 0] : f32 from vector<1x1x1xf32>
    %24 = vector.broadcast %23 : f32 to vector<1x128xf32>
    %c0_10 = arith.constant 0 : index
    %c0_11 = arith.constant 0 : index
    %25 = vector.load %arg4[%c0_10, %c0_11] : memref<1x128xf32, #tpu.memory_space<vmem>>, vector<1x128xf32>
    tpu.vector_store %arg4[%c0_10, %c0_11], %24 {strides = array<i32>} : memref<1x128xf32, #tpu.memory_space<vmem>>, vector<1x128xf32>,
    return
  }
  func.func @transform_0(%arg0: i32) -> (i32, i32) {
    %c0_i32 = arith.constant 0 : i32
    %c0_i32_0 = arith.constant 0 : i32
    return %arg0, %c0_i32 : i32, i32
  }
  func.func @transform_1(%arg0: i32) -> (i32, i32) {
    %c0_i32 = arith.constant 0 : i32
    %c0_i32_0 = arith.constant 0 : i32
    return %arg0, %c0_i32 : i32, i32
  }
  func.func @transform_2(%arg0: i32) -> (i32, i32) {
    %c0_i32 = arith.constant 0 : i32
    %c0_i32_0 = arith.constant 0 : i32
    return %arg0, %c0_i32 : i32, i32
  }
  func.func @transform_3(%arg0: i32) -> (i32, i32) {
    %c0_i32 = arith.constant 0 : i32
    %c0_i32_0 = arith.constant 0 : i32
    return %arg0, %c0_i32 : i32, i32
  }
}

</mosaic_0001>

<llo_original>
// kernel: tpu_custom_call.1
$region0: #{tpu_custom_call.1}
  #allocation0 [shape = 'u32[]', space=smem, size = 0x4, offset = 0x4, fixed_abs, tag = 'smem constant byte address 0x4 - core index']
  #allocation1 [shape = 'u32[144,128]{1,0:T(1,128)}', space=vmem, size = 0x12000, scoped, tag = 'internal scratch']
  %s0 = inlined_call_operand.vmem [shape: f32[8,32], index: 0, kind: input, shape index: {}]
  %s1 = inlined_call_operand.hbm [shape: f32[8,32], index: 1, kind: input, shape index: {}]
  %s2 = inlined_call_operand.vmem [shape: f32[8,1], index: 2, kind: input, shape index: {}]
  %s3 = inlined_call_operand.hbm [shape: f32[1,128], index: 3, kind: output, shape index: {}]
  %s4 = sld [smem:[#allocation0]]
  $region26: #{tpu_custom_call.1} parent=0
    _
  %s6 = ssub.s32 1, %s4
  %s7 = scalar_select 0, %s6, %s4
  $region1: #{tpu_custom_call.1} parent=0
    #allocation2 [shape = 'u8[4096]{0}', space=vmem, size = 0x1000, scoped, tag = 'input window, operand 1, single buffered']
    #allocation3 [shape = 's32[1]{0}', space=sflag, size = 0x4, scoped, tag = 'scoped memory for tpu_custom_call.1']
    #allocation4 [shape = 's32[1]{0}', space=sflag, size = 0x4, scoped, tag = 'scoped memory for tpu_custom_call.1']
    #allocation5 [shape = 'u8[512]{0}', space=vmem, size = 0x400, scoped, tag = 'output window, operand 0, single buffered']
    %8 = vsyncpa [#allocation3], 0
    %9 = vsyncpa [#allocation4], 0
    // Predicated region
    $region2: #{tpu_custom_call.1} parent=1 // pred_check
      _
    $region3: #{tpu_custom_call.1} parent=1 // pred_check_branch
      %11 = sbr.rel (0) target = $region5
    $region4: #{tpu_custom_call.1} parent=1 // pred_region
      _
    $region5: #{tpu_custom_call.1} parent=1 // pred_fallthru
      _
    // Predicated region
    $region6: #{tpu_custom_call.1} parent=1 // pred_check
      _
    $region7: #{tpu_custom_call.1} parent=1 // pred_check_branch
      %13 = sbr.rel (0) target = $region9
    $region8: #{tpu_custom_call.1} parent=1 // pred_region
      %s15 = ssub.s32 128, 128
      %16 = vsyncadd [#allocation3], %s15
      %s18 = sshll.u32 [#allocation2], 4
      %s19 = int_to_ptr.vmem [resolvable:$true] %s18
      %21 = dma.hbm_to_vmem [thread:$0]  %s1, 128, %s19, [#allocation3]
    $region9: #{tpu_custom_call.1} parent=1 // pred_fallthru
      _
    // Predicated region
    $region10: #{tpu_custom_call.1} parent=1 // pred_check
      _
    $region11: #{tpu_custom_call.1} parent=1 // pred_check_branch
      %23 = sbr.rel (0) target = $region13
    $region12: #{tpu_custom_call.1} parent=1 // pred_region
      _
    $region13: #{tpu_custom_call.1} parent=1 // pred_fallthru
      _
    // Predicated region
    $region14: #{tpu_custom_call.1} parent=1 // pred_check
      _
    $region15: #{tpu_custom_call.1} parent=1 // pred_check_branch
      %25 = sbr.rel (0) target = $region17
    $region16: #{tpu_custom_call.1} parent=1 // pred_region
      %26 = dma.done [#allocation3], 128
    $region17: #{tpu_custom_call.1} parent=1 // pred_fallthru
      _
    %v27 = vld [vmem:[%s0] sm:$0xff]
    %v28 = vld [vmem:[#allocation2] sm:$0xff]
    %v29 = vld [vmem:[%s2] sm:$0xff]
    %v30 = vsub.f32 %v27, %v28
    %v31 = vadd.f32 %v30, 1e-06
    %v32 = vmul.f32 %v31, %v31
    %vm33 = vcmask 261120
    %v34 = vsel %vm33, %v32, 0.0
    %35 = vadd.xlane.f32.xlu0 %v34
    %v36 = vpop.xlane.xlu0 %35
    %v37 = vrsqrt.pop %v36
    %v38 = vmul.f32 %v36, %v37
    %vm39 = vcmp.eq.f32.partialorder %v36, inf
    %v40 = vsel %vm39, %v36, %v38
    %vm41 = vcmp.eq.f32.partialorder %v36, 0.0
    %v42 = vand.u32 %v36, 2147483648
    %v43 = vsel %vm41, %v42, %v40
    %v44 = vsub.f32 2.0, %v43
    %v45 = vmax.f32 %v44, 0.0
    %v46 = vsub.f32 1.0, %v29
    %v47 = vmul.f32 %v46, %v36
    %v48 = vmul.f32 %v45, %v45
    %v49 = vmul.f32 %v29, %v48
    %v50 = vadd.f32 %v47, %v49
    %vm51 = vcmask 7168
    %v52 = vsel %vm51, %v50, 0.0
    %53 = vadd.xlane.f32.xlu0 %v52
    %v54 = vpop.xlane.xlu0 %53
    %v55 = vrot.slane %v54, 4
    %v56 = vadd.f32 %v54, %v55
    %v57 = vrot.slane %v56, 2
    %v58 = vadd.f32 %v56, %v57
    %v59 = vrot.slane %v58, 1
    %v60 = vadd.f32 %v58, %v59
    %s61 = vtos %v60
    %v62 = vstv %s61
    %63 = vst [vmem:[#allocation5] sm:$0x1] %v62
    // Predicated region
    $region18: #{tpu_custom_call.1} parent=1 // pred_check
      _
    $region19: #{tpu_custom_call.1} parent=1 // pred_check_branch
      %65 = sbr.rel (0) target = $region21
    $region20: #{tpu_custom_call.1} parent=1 // pred_region
      %s67 = ssub.s32 16, 16
      %68 = vsyncadd [#allocation4], %s67
      %s70 = sshll.u32 [#allocation5], 4
      %s71 = int_to_ptr.vmem [resolvable:$true] %s70
      %73 = dma.vmem_to_hbm [thread:$0]  %s71, 16, %s3, [#allocation4]
    $region21: #{tpu_custom_call.1} parent=1 // pred_fallthru
      _
    // Predicated region
    $region22: #{tpu_custom_call.1} parent=1 // pred_check
      _
    $region23: #{tpu_custom_call.1} parent=1 // pred_check_branch
      %75 = sbr.rel (0) target = $region25
    $region24: #{tpu_custom_call.1} parent=1 // pred_region
      %76 = dma.done [#allocation4], 16
    $region25: #{tpu_custom_call.1} parent=1 // pred_fallthru
      _
    %77 = vsyncpa [#allocation3], 1
    %78 = vsyncpa [#allocation4], 1

</llo_original>
